<compile_context>
chip_gen: v5e
topology: v5e:2x2
jax: 0.10.0
libtpu: 0.0.40
codegen_flags: <defaults>
</compile_context>

<pallas_src>
import functools

import jax
import jax.numpy as jnp
from jax import lax
from jax.experimental import pallas as pl
from jax.experimental.pallas import tpu as pltpu

EPSILON = 0.1       # cfg.MODEL.LOSSES.CE.EPSILON
ALPHA = 0.6         # global_align_loss positive margin
BETA = 0.4          # global_align_loss negative margin
SCALE_POS = 10.0
SCALE_NEG = 40.0
AUG_SCALE = 40.0    # aug_align_loss scale
AUG_BETA = 0.4      # aug_align_loss beta

_NEG_BIG = -1e30    # -inf stand-in that stays NaN-free through exp/max math


def _softplus(x):
    # stable softplus: max(x,0) + log(1+exp(-|x|)); 1 exp + 1 log per element.
    return jnp.maximum(x, 0.0) + jnp.log(1.0 + jnp.exp(-jnp.abs(x)))


def _l2normalize(x):
    # == x / max(||x||, 1e-12), i.e. F.normalize(eps=1e-12), via a single rsqrt.
    ss = jnp.sum(x * x, axis=-1, keepdims=True)
    return x * lax.rsqrt(jnp.maximum(ss, 1e-24))


def _loss_kernel(vt_ref, neg_ref, labc_ref, labr_ref, proj_ref, out_ref,
                 m_s, l_s, zsum_s, zlab_s, *,
                 n_valid, n_pad, c_valid, c_blk, num_neg, epsilon):
    ci = pl.program_id(0)
    n_blocks = pl.num_programs(0)
    inv_n = 1.0 / float(n_valid)

    @pl.when(ci == 0)
    def _init():
        m_s[...] = jnp.full_like(m_s, _NEG_BIG)
        l_s[...] = jnp.zeros_like(l_s)
        zsum_s[...] = jnp.zeros_like(zsum_s)
        zlab_s[...] = jnp.zeros_like(zlab_s)

    # ----------------- instance loss: stream one class block (online LSE) ------
    vt = vt_ref[...]                                            # (2Np, Dp) native
    logits = jnp.dot(vt, proj_ref[...],
                     preferred_element_type=jnp.float32)        # (2Np, Cblk) f32
    col = ci * c_blk + lax.broadcasted_iota(jnp.int32, logits.shape, 1)
    col_ok = col < c_valid                                      # mask padded classes
    blk_max = jnp.max(jnp.where(col_ok, logits, _NEG_BIG), axis=-1, keepdims=True)
    m_new = jnp.maximum(m_s[...], blk_max)
    scale_old = jnp.exp(m_s[...] - m_new)
    p = jnp.where(col_ok, jnp.exp(logits - m_new), 0.0)
    l_s[...] = scale_old * l_s[...] + jnp.sum(p, axis=-1, keepdims=True)
    m_s[...] = m_new
    zsum_s[...] += jnp.sum(jnp.where(col_ok, logits, 0.0), axis=-1, keepdims=True)
    zlab_s[...] += jnp.sum(jnp.where(col == labc_ref[...], logits, 0.0),
                           axis=-1, keepdims=True)

    # ----------------- finalize on the last class block ------------------------
    @pl.when(ci == n_blocks - 1)
    def _finalize():
        # --- instance (label-smoothed CE, one-hot eliminated algebraically) ----
        lse = m_s[...] + jnp.log(l_s[...])                      # (2Np, 1)
        ce_rows = (lse - (1.0 - epsilon) * zlab_s[...]
                   - (epsilon / float(c_valid)) * zsum_s[...])
        row2 = lax.broadcasted_iota(jnp.int32, (2 * n_pad, 1), 0)
        row2_ok = jnp.logical_or(
            row2 < n_valid,
            jnp.logical_and(row2 >= n_pad, row2 < n_pad + n_valid))
        inst = jnp.sum(jnp.where(row2_ok, ce_rows, 0.0),
                       axis=(0, 1), keepdims=True) * inv_n      # (1,1)

        # --- global align (fused pos/neg margins -> one softplus) --------------
        v = vt[0:n_pad, :].astype(jnp.float32)
        t = vt[n_pad:2 * n_pad, :].astype(jnp.float32)
        vn = _l2normalize(v)
        tn = _l2normalize(t)
        sim = lax.dot_general(vn, tn, (((1,), (1,)), ((), ())),
                              preferred_element_type=jnp.float32)   # (Np, Np)
        pos = labc_ref[0:n_pad, :] == labr_ref[...]                 # (Np, Np)
        arg = jnp.where(pos, -SCALE_POS * (sim - ALPHA),
                        SCALE_NEG * (sim - BETA))
        ri = lax.broadcasted_iota(jnp.int32, (n_pad, n_pad), 0)
        cj = lax.broadcasted_iota(jnp.int32, (n_pad, n_pad), 1)
        pair_ok = jnp.logical_and(ri < n_valid, cj < n_valid)
        glob = jnp.sum(jnp.where(pair_ok, _softplus(arg), 0.0),
                       axis=(0, 1), keepdims=True) * inv_n          # (1,1)

        # --- aug align: stream negatives per m (no (M,N,D) broadcast) ----------
        row_ok = lax.broadcasted_iota(jnp.int32, (n_pad, 1), 0) < n_valid

        def aug_body(mi, acc):
            nm = _l2normalize(neg_ref[mi].astype(jnp.float32))      # (Np, Dp)
            s = jnp.sum(vn * nm, axis=-1, keepdims=True)            # (Np, 1)
            sp = _softplus(AUG_SCALE * (s - AUG_BETA))
            return acc + jnp.sum(jnp.where(row_ok, sp, 0.0),
                                 axis=(0, 1), keepdims=True)

        aug = lax.fori_loop(0, num_neg, aug_body,
                            jnp.zeros((1, 1), jnp.float32),
                            unroll=True) * inv_n                    # (1,1)

        # --- single lane-dense output: lanes 0/1/2 = inst / glob / aug ---------
        lane = lax.broadcasted_iota(jnp.int32, (1, 128), 1)
        out_ref[...] = (jnp.where(lane == 0, inst, 0.0)
                        + jnp.where(lane == 1, glob, 0.0)
                        + jnp.where(lane == 2, aug, 0.0))


def _round_up(x, k):
    return (x + k - 1) // k * k


@functools.partial(jax.jit, static_argnames=("num_classes", "epsilon"))
def loss_computation(projection, visual_embed, textual_embed,
                     neg_textual_embed, labels, *, num_classes,
                     epsilon=EPSILON):
    """Forward pass of LossComputation. Returns dict of three scalar losses."""
    n, d = visual_embed.shape
    num_neg = neg_textual_embed.shape[0] // n
    c = int(num_classes)

    # Lane/sublane-friendly padded sizes; class tile is a multiple of 128 and
    # sized to keep the double-buffered projection block modest even on v7x.
    n_pad = _round_up(n, 8)
    d_pad = _round_up(d, 128)
    c_blk = min(_round_up(c, 128), 1024)
    c_pad = _round_up(c, c_blk)
    n_cblocks = c_pad // c_blk

    dt = visual_embed.dtype       # keep native dtype (bf16 stays bf16 for MXU)
    v = jnp.zeros((n_pad, d_pad), dt).at[:n, :d].set(visual_embed)
    t = jnp.zeros((n_pad, d_pad), dt).at[:n, :d].set(textual_embed)
    vt = jnp.concatenate([v, t], axis=0)                         # (2*Np, Dp)
    neg = neg_textual_embed.reshape(num_neg, n, d)
    neg_p = jnp.zeros((num_neg, n_pad, d_pad), dt).at[:, :n, :d].set(neg)
    proj_p = jnp.zeros((d_pad, c_pad), projection.dtype).at[:d, :c].set(projection)

    lab = jnp.full((n_pad,), -1, jnp.int32).at[:n].set(labels.astype(jnp.int32))
    lab_col = jnp.concatenate([lab, lab])[:, None]               # (2*Np, 1)
    lab_row = lab[None, :]                                       # (1, Np)

    kernel = functools.partial(
        _loss_kernel, n_valid=n, n_pad=n_pad, c_valid=c, c_blk=c_blk,
        num_neg=num_neg, epsilon=float(epsilon))

    elt = jnp.dtype(dt).itemsize
    vmem_bytes = (2 * d_pad * c_blk * elt          # double-buffered proj tile
                  + 2 * n_pad * d_pad * elt        # vt (resident)
                  + num_neg * n_pad * d_pad * elt  # negatives (resident)
                  + 4 * 2 * n_pad * c_blk          # f32 logits intermediate
                  + (2 << 20))                     # scratch / headroom
    vmem_limit = int(min(64 * 1024 * 1024,
                         max(32 * 1024 * 1024, 2 * vmem_bytes)))

    out = pl.pallas_call(
        kernel,
        out_shape=jax.ShapeDtypeStruct((1, 128), jnp.float32),
        grid_spec=pltpu.PrefetchScalarGridSpec(
            num_scalar_prefetch=0,
            grid=(n_cblocks,),
            in_specs=[
                pl.BlockSpec((2 * n_pad, d_pad), lambda ci: (0, 0)),
                pl.BlockSpec((num_neg, n_pad, d_pad), lambda ci: (0, 0, 0)),
                pl.BlockSpec((2 * n_pad, 1), lambda ci: (0, 0)),
                pl.BlockSpec((1, n_pad), lambda ci: (0, 0)),
                pl.BlockSpec((d_pad, c_blk), lambda ci: (0, ci)),
            ],
            out_specs=pl.BlockSpec((1, 128), lambda ci: (0, 0)),
            scratch_shapes=[
                pltpu.VMEM((2 * n_pad, 1), jnp.float32),   # running max
                pltpu.VMEM((2 * n_pad, 1), jnp.float32),   # running sum-exp
                pltpu.VMEM((2 * n_pad, 1), jnp.float32),   # sum_c z
                pltpu.VMEM((2 * n_pad, 1), jnp.float32),   # z[label]
            ],
        ),
        compiler_params=pltpu.CompilerParams(
            dimension_semantics=("arbitrary",),
            vmem_limit_bytes=vmem_limit),
    )(vt, neg_p, lab_col, lab_row, proj_p)

    return {
        "instance_loss": out[0, 0],
        "global_align_loss": out[0, 1],
        "aug_align_loss": out[0, 2],
    }


if __name__ == "__main__":
    # Small deterministic shapes consistent with the module:
    #   N (batch) = 8, D (FEATURE_SIZE) = 32, C (NUM_CLASSES) = 16, M (neg) = 2
    N, D, C, M = 8, 32, 16, 2

    key = jax.random.PRNGKey(0)
    k_proj, k_v, k_t, k_neg = jax.random.split(key, 4)

    limit = (6.0 / (D + C)) ** 0.5   # xavier_uniform for the projection param
    projection = jax.random.uniform(k_proj, (D, C), jnp.float32, -limit, limit)

    visual_embed = jax.random.normal(k_v, (N, D), jnp.float32)
    textual_embed = jax.random.normal(k_t, (N, D), jnp.float32)
    neg_textual_embed = jax.random.normal(k_neg, (M * N, D), jnp.float32)

    # labels: stand-in for `caption.get_field('id')` (repeats -> positive pairs)
    labels = jnp.array([0, 1, 2, 3, 0, 1, 2, 3], dtype=jnp.int32)

    losses = loss_computation(projection, visual_embed, textual_embed,
                              neg_textual_embed, labels, num_classes=C)
    losses = jax.tree_util.tree_map(jax.block_until_ready, losses)

    # ---- plain-JAX reference of the same math (correctness guard) -------------
    def _reference():
        onehot = jax.nn.one_hot(labels, C, dtype=jnp.float32)
        tgt = (1.0 - EPSILON) * onehot + EPSILON / C

        def ce(e):
            lp = jax.nn.log_softmax(e @ projection, axis=-1)
            return jnp.sum(-tgt * lp) / N

        inst = ce(visual_embed) + ce(textual_embed)
        nrm = lambda x: x / jnp.maximum(
            jnp.linalg.norm(x, axis=-1, keepdims=True), 1e-12)
        vn, tn = nrm(visual_embed), nrm(textual_embed)
        sim = vn @ tn.T
        pm = (labels[:, None] == labels[None, :]).astype(jnp.float32)
        glob = jnp.sum(pm * jnp.log1p(jnp.exp(-SCALE_POS * (sim - ALPHA)))
                       + (1 - pm) * jnp.log1p(jnp.exp(SCALE_NEG * (sim - BETA)))) / N
        negn = nrm(neg_textual_embed.reshape(M, N, D))
        asim = jnp.sum(vn[None] * negn, axis=-1)
        aug = jnp.sum(jnp.log1p(jnp.exp(AUG_SCALE * (asim - AUG_BETA)))) / N
        return {"instance_loss": inst, "global_align_loss": glob,
                "aug_align_loss": aug}

    ref = _reference()
    for name in ("instance_loss", "global_align_loss", "aug_align_loss"):
        got, want = float(losses[name]), float(ref[name])
        assert got == got, f"NaN in {name}"
        assert abs(got - want) <= 1e-3 * max(1.0, abs(want)), (name, got, want)

    print("KERNEL_OK")
</pallas_src>

<mosaic_0001>
module attributes {stable_mosaic.version = 11 : i64} {
  func.func @_loss_kernel(%arg0: i32, %arg1: memref<16x128xf32, #tpu.memory_space<vmem>>, %arg2: memref<2x8x128xf32, #tpu.memory_space<vmem>>, %arg3: memref<16x1xi32, #tpu.memory_space<vmem>>, %arg4: memref<1x8xi32, #tpu.memory_space<vmem>>, %arg5: memref<128x128xf32, #tpu.memory_space<vmem>>, %arg6: memref<1x128xf32, #tpu.memory_space<vmem>>, %arg7: memref<16x1xf32, #tpu.memory_space<vmem>>, %arg8: memref<16x1xf32, #tpu.memory_space<vmem>>, %arg9: memref<16x1xf32, #tpu.memory_space<vmem>>, %arg10: memref<16x1xf32, #tpu.memory_space<vmem>>) attributes {dimension_semantics = [#tpu.dimension_semantics<arbitrary>], iteration_bounds = array<i64: 1>, scalar_prefetch = 0 : i64, scratch_operands = 4 : i64, tpu.core_type = #tpu.core_type<tc>, window_params = [{pipeline_mode = #tpu.pipeline_mode<synchronous>, transform_indices = @transform_0, window_bounds = array<i64: 16, 128>}, {pipeline_mode = #tpu.pipeline_mode<synchronous>, transform_indices = @transform_1, window_bounds = array<i64: 2, 8, 128>}, {pipeline_mode = #tpu.pipeline_mode<synchronous>, transform_indices = @transform_2, window_bounds = array<i64: 16, 1>}, {pipeline_mode = #tpu.pipeline_mode<synchronous>, transform_indices = @transform_3, window_bounds = array<i64: 1, 8>}, {transform_indices = @transform_4, window_bounds = array<i64: 128, 128>}, {pipeline_mode = #tpu.pipeline_mode<synchronous>, transform_indices = @transform_5, window_bounds = array<i64: 1, 128>}]} {
    %c0_i32 = arith.constant 0 : i32
    %0 = arith.cmpi eq, %arg0, %c0_i32 : i32
    %1 = arith.extui %0 : i1 to i32
    %c0_i32_0 = arith.constant 0 : i32
    %2 = arith.cmpi ne, %1, %c0_i32_0 : i32
    scf.if %2 {
      %cst_34 = arith.constant -1.000000e+30 : f32
      %53 = vector.broadcast %cst_34 : f32 to vector<16x1xf32>
      %c0_35 = arith.constant 0 : index
      %c0_36 = arith.constant 0 : index
      %54 = vector.load %arg7[%c0_35, %c0_36] : memref<16x1xf32, #tpu.memory_space<vmem>>, vector<16x1xf32>
      tpu.vector_store %arg7[%c0_35, %c0_36], %53 {strides = array<i32>} : memref<16x1xf32, #tpu.memory_space<vmem>>, vector<16x1xf32>,
      %cst_37 = arith.constant 0.000000e+00 : f32
      %55 = vector.broadcast %cst_37 : f32 to vector<16x1xf32>
      %c0_38 = arith.constant 0 : index
      %c0_39 = arith.constant 0 : index
      %56 = vector.load %arg8[%c0_38, %c0_39] : memref<16x1xf32, #tpu.memory_space<vmem>>, vector<16x1xf32>
      tpu.vector_store %arg8[%c0_38, %c0_39], %55 {strides = array<i32>} : memref<16x1xf32, #tpu.memory_space<vmem>>, vector<16x1xf32>,
      %cst_40 = arith.constant 0.000000e+00 : f32
      %57 = vector.broadcast %cst_40 : f32 to vector<16x1xf32>
      %c0_41 = arith.constant 0 : index
      %c0_42 = arith.constant 0 : index
      %58 = vector.load %arg9[%c0_41, %c0_42] : memref<16x1xf32, #tpu.memory_space<vmem>>, vector<16x1xf32>
      tpu.vector_store %arg9[%c0_41, %c0_42], %57 {strides = array<i32>} : memref<16x1xf32, #tpu.memory_space<vmem>>, vector<16x1xf32>,
      %cst_43 = arith.constant 0.000000e+00 : f32
      %59 = vector.broadcast %cst_43 : f32 to vector<16x1xf32>
      %c0_44 = arith.constant 0 : index
      %c0_45 = arith.constant 0 : index
      %60 = vector.load %arg10[%c0_44, %c0_45] : memref<16x1xf32, #tpu.memory_space<vmem>>, vector<16x1xf32>
      tpu.vector_store %arg10[%c0_44, %c0_45], %59 {strides = array<i32>} : memref<16x1xf32, #tpu.memory_space<vmem>>, vector<16x1xf32>,
    } else {
    }
    %c0 = arith.constant 0 : index
    %c0_1 = arith.constant 0 : index
    %3 = vector.load %arg1[%c0, %c0_1] : memref<16x128xf32, #tpu.memory_space<vmem>>, vector<16x128xf32>
    %c0_2 = arith.constant 0 : index
    %c0_3 = arith.constant 0 : index
    %4 = vector.load %arg5[%c0_2, %c0_3] : memref<128x128xf32, #tpu.memory_space<vmem>>, vector<128x128xf32>
    %cst = arith.constant dense<0.000000e+00> : vector<16x128xf32>
    %5 = tpu.matmul %3, %4, %cst {dimension_numbers = #tpu.dot_dimension_numbers<[1], [0], [0], [1], [0, 0, 1, 1], [], []>} : vector<16x128xf32>, vector<128x128xf32>, vector<16x128xf32> -> vector<16x128xf32>
    %c128_i32 = arith.constant 128 : i32
    %6 = arith.muli %arg0, %c128_i32 : i32
    %7 = tpu.iota {dimensions = array<i32: 1>} : vector<16x128xi32>
    %8 = vector.broadcast %6 : i32 to vector<16x128xi32>
    %9 = arith.addi %8, %7 : vector<16x128xi32>
    %c16_i32 = arith.constant 16 : i32
    %10 = vector.broadcast %c16_i32 : i32 to vector<16x128xi32>
    %11 = arith.cmpi slt, %9, %10 : vector<16x128xi32>
    %cst_4 = arith.constant -1.000000e+30 : f32
    %12 = vector.broadcast %cst_4 : f32 to vector<16x128xf32>
    %13 = arith.select %11, %5, %12 : vector<16x128xi1>, vector<16x128xf32>
    %cst_5 = arith.constant dense<0xFF800000> : vector<16xf32>
    %14 = vector.multi_reduction <maximumf>, %13, %cst_5 [1] : vector<16x128xf32> to vector<16xf32>
    %15 = vector.shape_cast %14 : vector<16xf32> to vector<16x1xf32>
    %c0_6 = arith.constant 0 : index
    %c0_7 = arith.constant 0 : index
    %16 = vector.load %arg7[%c0_6, %c0_7] : memref<16x1xf32, #tpu.memory_space<vmem>>, vector<16x1xf32>
    %17 = arith.maximumf %16, %15 : vector<16x1xf32>
    %c0_8 = arith.constant 0 : index
    %c0_9 = arith.constant 0 : index
    %18 = vector.load %arg7[%c0_8, %c0_9] : memref<16x1xf32, #tpu.memory_space<vmem>>, vector<16x1xf32>
    %19 = arith.subf %18, %17 : vector<16x1xf32>
    %20 = math.exp %19 : vector<16x1xf32>
    %21 = vector.broadcast %17 : vector<16x1xf32> to vector<16x128xf32>
    %22 = arith.subf %5, %21 : vector<16x128xf32>
    %23 = math.exp %22 : vector<16x128xf32>
    %cst_10 = arith.constant 0.000000e+00 : f32
    %24 = vector.broadcast %cst_10 : f32 to vector<16x128xf32>
    %25 = arith.select %11, %23, %24 : vector<16x128xi1>, vector<16x128xf32>
    %c0_11 = arith.constant 0 : index
    %c0_12 = arith.constant 0 : index
    %26 = vector.load %arg8[%c0_11, %c0_12] : memref<16x1xf32, #tpu.memory_space<vmem>>, vector<16x1xf32>
    %27 = arith.mulf %20, %26 : vector<16x1xf32>
    %cst_13 = arith.constant dense<0.000000e+00> : vector<16xf32>
    %28 = vector.multi_reduction <add>, %25, %cst_13 [1] : vector<16x128xf32> to vector<16xf32>
    %29 = vector.shape_cast %28 : vector<16xf32> to vector<16x1xf32>
    %30 = arith.addf %27, %29 : vector<16x1xf32>
    %c0_14 = arith.constant 0 : index
    %c0_15 = arith.constant 0 : index
    %31 = vector.load %arg8[%c0_14, %c0_15] : memref<16x1xf32, #tpu.memory_space<vmem>>, vector<16x1xf32>
    tpu.vector_store %arg8[%c0_14, %c0_15], %30 {strides = array<i32>} : memref<16x1xf32, #tpu.memory_space<vmem>>, vector<16x1xf32>,
    %c0_16 = arith.constant 0 : index
    %c0_17 = arith.constant 0 : index
    %32 = vector.load %arg7[%c0_16, %c0_17] : memref<16x1xf32, #tpu.memory_space<vmem>>, vector<16x1xf32>
    tpu.vector_store %arg7[%c0_16, %c0_17], %17 {strides = array<i32>} : memref<16x1xf32, #tpu.memory_space<vmem>>, vector<16x1xf32>,
    %c0_18 = arith.constant 0 : index
    %c0_19 = arith.constant 0 : index
    %33 = vector.load %arg9[%c0_18, %c0_19] : memref<16x1xf32, #tpu.memory_space<vmem>>, vector<16x1xf32>
    %cst_20 = arith.constant 0.000000e+00 : f32
    %34 = vector.broadcast %cst_20 : f32 to vector<16x128xf32>
    %35 = arith.select %11, %5, %34 : vector<16x128xi1>, vector<16x128xf32>
    %cst_21 = arith.constant dense<0.000000e+00> : vector<16xf32>
    %36 = vector.multi_reduction <add>, %35, %cst_21 [1] : vector<16x128xf32> to vector<16xf32>
    %37 = vector.shape_cast %36 : vector<16xf32> to vector<16x1xf32>
    %38 = arith.addf %33, %37 : vector<16x1xf32>
    %c0_22 = arith.constant 0 : index
    %c0_23 = arith.constant 0 : index
    %39 = vector.load %arg9[%c0_22, %c0_23] : memref<16x1xf32, #tpu.memory_space<vmem>>, vector<16x1xf32>
    tpu.vector_store %arg9[%c0_22, %c0_23], %38 {strides = array<i32>} : memref<16x1xf32, #tpu.memory_space<vmem>>, vector<16x1xf32>,
    %c0_24 = arith.constant 0 : index
    %c0_25 = arith.constant 0 : index
    %40 = vector.load %arg10[%c0_24, %c0_25] : memref<16x1xf32, #tpu.memory_space<vmem>>, vector<16x1xf32>
    %c0_26 = arith.constant 0 : index
    %c0_27 = arith.constant 0 : index
    %41 = vector.load %arg3[%c0_26, %c0_27] : memref<16x1xi32, #tpu.memory_space<vmem>>, vector<16x1xi32>
    %42 = vector.broadcast %41 : vector<16x1xi32> to vector<16x128xi32>
    %43 = arith.cmpi eq, %9, %42 : vector<16x128xi32>
    %cst_28 = arith.constant 0.000000e+00 : f32
    %44 = vector.broadcast %cst_28 : f32 to vector<16x128xf32>
    %45 = arith.select %43, %5, %44 : vector<16x128xi1>, vector<16x128xf32>
    %cst_29 = arith.constant dense<0.000000e+00> : vector<16xf32>
    %46 = vector.multi_reduction <add>, %45, %cst_29 [1] : vector<16x128xf32> to vector<16xf32>
    %47 = vector.shape_cast %46 : vector<16xf32> to vector<16x1xf32>
    %48 = arith.addf %40, %47 : vector<16x1xf32>
    %c0_30 = arith.constant 0 : index
    %c0_31 = arith.constant 0 : index
    %49 = vector.load %arg10[%c0_30, %c0_31] : memref<16x1xf32, #tpu.memory_space<vmem>>, vector<16x1xf32>
    tpu.vector_store %arg10[%c0_30, %c0_31], %48 {strides = array<i32>} : memref<16x1xf32, #tpu.memory_space<vmem>>, vector<16x1xf32>,
    %c0_i32_32 = arith.constant 0 : i32
    %50 = arith.cmpi eq, %arg0, %c0_i32_32 : i32
    %51 = arith.extui %50 : i1 to i32
    %c0_i32_33 = arith.constant 0 : i32
    %52 = arith.cmpi ne, %51, %c0_i32_33 : i32
    scf.if %52 {
      %c0_34 = arith.constant 0 : index
      %c0_35 = arith.constant 0 : index
      %53 = vector.load %arg7[%c0_34, %c0_35] : memref<16x1xf32, #tpu.memory_space<vmem>>, vector<16x1xf32>
      %c0_36 = arith.constant 0 : index
      %c0_37 = arith.constant 0 : index
      %54 = vector.load %arg8[%c0_36, %c0_37] : memref<16x1xf32, #tpu.memory_space<vmem>>, vector<16x1xf32>
      %55 = math.log %54 : vector<16x1xf32>
      %56 = arith.addf %53, %55 : vector<16x1xf32>
      %c0_38 = arith.constant 0 : index
      %c0_39 = arith.constant 0 : index
      %57 = vector.load %arg10[%c0_38, %c0_39] : memref<16x1xf32, #tpu.memory_space<vmem>>, vector<16x1xf32>
      %cst_40 = arith.constant 0.899999976 : f32
      %58 = vector.broadcast %cst_40 : f32 to vector<16x1xf32>
      %59 = arith.mulf %58, %57 : vector<16x1xf32>
      %60 = arith.subf %56, %59 : vector<16x1xf32>
      %c0_41 = arith.constant 0 : index
      %c0_42 = arith.constant 0 : index
      %61 = vector.load %arg9[%c0_41, %c0_42] : memref<16x1xf32, #tpu.memory_space<vmem>>, vector<16x1xf32>
      %cst_43 = arith.constant 6.250000e-03 : f32
      %62 = vector.broadcast %cst_43 : f32 to vector<16x1xf32>
      %63 = arith.mulf %62, %61 : vector<16x1xf32>
      %64 = arith.subf %60, %63 : vector<16x1xf32>
      %65 = tpu.iota {dimensions = array<i32: 0>} : vector<16x1xi32>
      %c8_i32 = arith.constant 8 : i32
      %66 = vector.broadcast %c8_i32 : i32 to vector<16x1xi32>
      %67 = arith.cmpi slt, %65, %66 : vector<16x1xi32>
      %c8_i32_44 = arith.constant 8 : i32
      %68 = vector.broadcast %c8_i32_44 : i32 to vector<16x1xi32>
      %69 = arith.cmpi sge, %65, %68 : vector<16x1xi32>
      %c16_i32_45 = arith.constant 16 : i32
      %70 = vector.broadcast %c16_i32_45 : i32 to vector<16x1xi32>
      %71 = arith.cmpi slt, %65, %70 : vector<16x1xi32>
      %72 = arith.andi %69, %71 : vector<16x1xi1>
      %73 = arith.ori %67, %72 : vector<16x1xi1>
      %cst_46 = arith.constant 0.000000e+00 : f32
      %74 = vector.broadcast %cst_46 : f32 to vector<16x1xf32>
      %75 = arith.select %73, %64, %74 : vector<16x1xi1>, vector<16x1xf32>
      %76 = vector.shape_cast %75 : vector<16x1xf32> to vector<1x16x1xf32>
      %cst_47 = arith.constant dense<0.000000e+00> : vector<1xf32>
      %77 = vector.multi_reduction <add>, %76, %cst_47 [1, 2] : vector<1x16x1xf32> to vector<1xf32>
      %78 = vector.shape_cast %77 : vector<1xf32> to vector<1x1x1xf32>
      %79 = vector.extract %78[0, 0, 0] : f32 from vector<1x1x1xf32>
      %80 = vector.broadcast %79 : f32 to vector<1x1xf32>
      %cst_48 = arith.constant 1.250000e-01 : f32
      %81 = vector.broadcast %cst_48 : f32 to vector<1x1xf32>
      %82 = arith.mulf %80, %81 : vector<1x1xf32>
      %83 = vector.extract_strided_slice %3 {offsets = [0, 0], sizes = [8, 128], strides = [1, 1]} : vector<16x128xf32> to vector<8x128xf32>
      %84 = vector.extract_strided_slice %3 {offsets = [8, 0], sizes = [8, 128], strides = [1, 1]} : vector<16x128xf32> to vector<8x128xf32>
      %85 = arith.mulf %83, %83 : vector<8x128xf32>
      %cst_49 = arith.constant dense<0.000000e+00> : vector<8xf32>
      %86 = vector.multi_reduction <add>, %85, %cst_49 [1] : vector<8x128xf32> to vector<8xf32>
      %87 = vector.shape_cast %86 : vector<8xf32> to vector<8x1xf32>
      %cst_50 = arith.constant 1.000000e-24 : f32
      %88 = vector.broadcast %cst_50 : f32 to vector<8x1xf32>
      %89 = arith.maximumf %87, %88 : vector<8x1xf32>
      %90 = math.rsqrt %89 : vector<8x1xf32>
      %91 = vector.broadcast %90 : vector<8x1xf32> to vector<8x128xf32>
      %92 = arith.mulf %83, %91 : vector<8x128xf32>
      %93 = arith.mulf %84, %84 : vector<8x128xf32>
      %cst_51 = arith.constant dense<0.000000e+00> : vector<8xf32>
      %94 = vector.multi_reduction <add>, %93, %cst_51 [1] : vector<8x128xf32> to vector<8xf32>
      %95 = vector.shape_cast %94 : vector<8xf32> to vector<8x1xf32>
      %cst_52 = arith.constant 1.000000e-24 : f32
      %96 = vector.broadcast %cst_52 : f32 to vector<8x1xf32>
      %97 = arith.maximumf %95, %96 : vector<8x1xf32>
      %98 = math.rsqrt %97 : vector<8x1xf32>
      %99 = vector.broadcast %98 : vector<8x1xf32> to vector<8x128xf32>
      %100 = arith.mulf %84, %99 : vector<8x128xf32>
      %cst_53 = arith.constant dense<0.000000e+00> : vector<8x8xf32>
      %101 = tpu.matmul %92, %100, %cst_53 {dimension_numbers = #tpu.dot_dimension_numbers<[1], [1], [0], [0], [0, 0, 1, 0], [], []>} : vector<8x128xf32>, vector<8x128xf32>, vector<8x8xf32> -> vector<8x8xf32>
      %c0_54 = arith.constant 0 : index
      %c0_55 = arith.constant 0 : index
      %102 = vector.load %arg3[%c0_54, %c0_55] : memref<16x1xi32, #tpu.memory_space<vmem>>, vector<8x1xi32>
      %c0_56 = arith.constant 0 : index
      %c0_57 = arith.constant 0 : index
      %103 = vector.load %arg4[%c0_56, %c0_57] : memref<1x8xi32, #tpu.memory_space<vmem>>, vector<1x8xi32>
      %104 = vector.broadcast %102 : vector<8x1xi32> to vector<8x8xi32>
      %105 = vector.broadcast %103 : vector<1x8xi32> to vector<8x8xi32>
      %106 = arith.cmpi eq, %104, %105 : vector<8x8xi32>
      %cst_58 = arith.constant 6.000000e-01 : f32
      %107 = vector.broadcast %cst_58 : f32 to vector<8x8xf32>
      %108 = arith.subf %101, %107 : vector<8x8xf32>
      %cst_59 = arith.constant -1.000000e+01 : f32
      %109 = vector.broadcast %cst_59 : f32 to vector<8x8xf32>
      %110 = arith.mulf %109, %108 : vector<8x8xf32>
      %cst_60 = arith.constant 4.000000e-01 : f32
      %111 = vector.broadcast %cst_60 : f32 to vector<8x8xf32>
      %112 = arith.subf %101, %111 : vector<8x8xf32>
      %cst_61 = arith.constant 4.000000e+01 : f32
      %113 = vector.broadcast %cst_61 : f32 to vector<8x8xf32>
      %114 = arith.mulf %113, %112 : vector<8x8xf32>
      %115 = arith.select %106, %110, %114 : vector<8x8xi1>, vector<8x8xf32>
      %116 = tpu.iota {dimensions = array<i32: 0>} : vector<8x8xi32>
      %117 = tpu.iota {dimensions = array<i32: 1>} : vector<8x8xi32>
      %c8_i32_62 = arith.constant 8 : i32
      %118 = vector.broadcast %c8_i32_62 : i32 to vector<8x8xi32>
      %119 = arith.cmpi slt, %116, %118 : vector<8x8xi32>
      %c8_i32_63 = arith.constant 8 : i32
      %120 = vector.broadcast %c8_i32_63 : i32 to vector<8x8xi32>
      %121 = arith.cmpi slt, %117, %120 : vector<8x8xi32>
      %122 = arith.andi %119, %121 : vector<8x8xi1>
      %cst_64 = arith.constant 0.000000e+00 : f32
      %123 = vector.broadcast %cst_64 : f32 to vector<8x8xf32>
      %124 = arith.maximumf %115, %123 : vector<8x8xf32>
      %125 = math.absf %115 : vector<8x8xf32>
      %cst_65 = arith.constant 0.000000e+00 : f32
      %126 = vector.broadcast %cst_65 : f32 to vector<8x8xf32>
      %127 = arith.subf %126, %125 : vector<8x8xf32>
      %128 = math.exp %127 : vector<8x8xf32>
      %cst_66 = arith.constant 1.000000e+00 : f32
      %129 = vector.broadcast %cst_66 : f32 to vector<8x8xf32>
      %130 = arith.addf %129, %128 : vector<8x8xf32>
      %131 = math.log %130 : vector<8x8xf32>
      %132 = arith.addf %124, %131 : vector<8x8xf32>
      %cst_67 = arith.constant 0.000000e+00 : f32
      %133 = vector.broadcast %cst_67 : f32 to vector<8x8xf32>
      %134 = arith.select %122, %132, %133 : vector<8x8xi1>, vector<8x8xf32>
      %135 = vector.shape_cast %134 : vector<8x8xf32> to vector<1x8x8xf32>
      %cst_68 = arith.constant dense<0.000000e+00> : vector<1xf32>
      %136 = vector.multi_reduction <add>, %135, %cst_68 [1, 2] : vector<1x8x8xf32> to vector<1xf32>
      %137 = vector.shape_cast %136 : vector<1xf32> to vector<1x1x1xf32>
      %138 = vector.extract %137[0, 0, 0] : f32 from vector<1x1x1xf32>
      %139 = vector.broadcast %138 : f32 to vector<1x1xf32>
      %cst_69 = arith.constant 1.250000e-01 : f32
      %140 = vector.broadcast %cst_69 : f32 to vector<1x1xf32>
      %141 = arith.mulf %139, %140 : vector<1x1xf32>
      %142 = tpu.iota {dimensions = array<i32: 0>} : vector<8x1xi32>
      %c8_i32_70 = arith.constant 8 : i32
      %143 = vector.broadcast %c8_i32_70 : i32 to vector<8x1xi32>
      %144 = arith.cmpi slt, %142, %143 : vector<8x1xi32>
      %cst_71 = arith.constant 0.000000e+00 : f32
      %145 = vector.broadcast %cst_71 : f32 to vector<1x1xf32>
      %c0_i32_72 = arith.constant 0 : i32
      %146 = arith.index_cast %c0_i32_72 : i32 to index
      %c0_73 = arith.constant 0 : index
      %c0_74 = arith.constant 0 : index
      %147 = vector.load %arg2[%146, %c0_73, %c0_74] : memref<2x8x128xf32, #tpu.memory_space<vmem>>, vector<1x8x128xf32>
      %148 = vector.shape_cast %147 : vector<1x8x128xf32> to vector<8x128xf32>
      %149 = arith.mulf %148, %148 : vector<8x128xf32>
      %cst_75 = arith.constant dense<0.000000e+00> : vector<8xf32>
      %150 = vector.multi_reduction <add>, %149, %cst_75 [1] : vector<8x128xf32> to vector<8xf32>
      %151 = vector.shape_cast %150 : vector<8xf32> to vector<8x1xf32>
      %cst_76 = arith.constant 1.000000e-24 : f32
      %152 = vector.broadcast %cst_76 : f32 to vector<8x1xf32>
      %153 = arith.maximumf %151, %152 : vector<8x1xf32>
      %154 = math.rsqrt %153 : vector<8x1xf32>
      %155 = vector.broadcast %154 : vector<8x1xf32> to vector<8x128xf32>
      %156 = arith.mulf %148, %155 : vector<8x128xf32>
      %157 = arith.mulf %92, %156 : vector<8x128xf32>
      %cst_77 = arith.constant dense<0.000000e+00> : vector<8xf32>
      %158 = vector.multi_reduction <add>, %157, %cst_77 [1] : vector<8x128xf32> to vector<8xf32>
      %159 = vector.shape_cast %158 : vector<8xf32> to vector<8x1xf32>
      %cst_78 = arith.constant 4.000000e-01 : f32
      %160 = vector.broadcast %cst_78 : f32 to vector<8x1xf32>
      %161 = arith.subf %159, %160 : vector<8x1xf32>
      %cst_79 = arith.constant 4.000000e+01 : f32
      %162 = vector.broadcast %cst_79 : f32 to vector<8x1xf32>
      %163 = arith.mulf %162, %161 : vector<8x1xf32>
      %cst_80 = arith.constant 0.000000e+00 : f32
      %164 = vector.broadcast %cst_80 : f32 to vector<8x1xf32>
      %165 = arith.maximumf %163, %164 : vector<8x1xf32>
      %166 = math.absf %163 : vector<8x1xf32>
      %cst_81 = arith.constant 0.000000e+00 : f32
      %167 = vector.broadcast %cst_81 : f32 to vector<8x1xf32>
      %168 = arith.subf %167, %166 : vector<8x1xf32>
      %169 = math.exp %168 : vector<8x1xf32>
      %cst_82 = arith.constant 1.000000e+00 : f32
      %170 = vector.broadcast %cst_82 : f32 to vector<8x1xf32>
      %171 = arith.addf %170, %169 : vector<8x1xf32>
      %172 = math.log %171 : vector<8x1xf32>
      %173 = arith.addf %165, %172 : vector<8x1xf32>
      %cst_83 = arith.constant 0.000000e+00 : f32
      %174 = vector.broadcast %cst_83 : f32 to vector<8x1xf32>
      %175 = arith.select %144, %173, %174 : vector<8x1xi1>, vector<8x1xf32>
      %176 = vector.shape_cast %175 : vector<8x1xf32> to vector<1x8x1xf32>
      %cst_84 = arith.constant dense<0.000000e+00> : vector<1xf32>
      %177 = vector.multi_reduction <add>, %176, %cst_84 [1, 2] : vector<1x8x1xf32> to vector<1xf32>
      %178 = vector.shape_cast %177 : vector<1xf32> to vector<1x1x1xf32>
      %179 = vector.extract %178[0, 0, 0] : f32 from vector<1x1x1xf32>
      %180 = vector.broadcast %179 : f32 to vector<1x1xf32>
      %181 = arith.addf %145, %180 : vector<1x1xf32>
      %c1_i32 = arith.constant 1 : i32
      %182 = arith.index_cast %c1_i32 : i32 to index
      %c0_85 = arith.constant 0 : index
      %c0_86 = arith.constant 0 : index
      %183 = vector.load %arg2[%182, %c0_85, %c0_86] : memref<2x8x128xf32, #tpu.memory_space<vmem>>, vector<1x8x128xf32>
      %184 = vector.shape_cast %183 : vector<1x8x128xf32> to vector<8x128xf32>
      %185 = arith.mulf %184, %184 : vector<8x128xf32>
      %cst_87 = arith.constant dense<0.000000e+00> : vector<8xf32>
      %186 = vector.multi_reduction <add>, %185, %cst_87 [1] : vector<8x128xf32> to vector<8xf32>
      %187 = vector.shape_cast %186 : vector<8xf32> to vector<8x1xf32>
      %cst_88 = arith.constant 1.000000e-24 : f32
      %188 = vector.broadcast %cst_88 : f32 to vector<8x1xf32>
      %189 = arith.maximumf %187, %188 : vector<8x1xf32>
      %190 = math.rsqrt %189 : vector<8x1xf32>
      %191 = vector.broadcast %190 : vector<8x1xf32> to vector<8x128xf32>
      %192 = arith.mulf %184, %191 : vector<8x128xf32>
      %193 = arith.mulf %92, %192 : vector<8x128xf32>
      %cst_89 = arith.constant dense<0.000000e+00> : vector<8xf32>
      %194 = vector.multi_reduction <add>, %193, %cst_89 [1] : vector<8x128xf32> to vector<8xf32>
      %195 = vector.shape_cast %194 : vector<8xf32> to vector<8x1xf32>
      %cst_90 = arith.constant 4.000000e-01 : f32
      %196 = vector.broadcast %cst_90 : f32 to vector<8x1xf32>
      %197 = arith.subf %195, %196 : vector<8x1xf32>
      %cst_91 = arith.constant 4.000000e+01 : f32
      %198 = vector.broadcast %cst_91 : f32 to vector<8x1xf32>
      %199 = arith.mulf %198, %197 : vector<8x1xf32>
      %cst_92 = arith.constant 0.000000e+00 : f32
      %200 = vector.broadcast %cst_92 : f32 to vector<8x1xf32>
      %201 = arith.maximumf %199, %200 : vector<8x1xf32>
      %202 = math.absf %199 : vector<8x1xf32>
      %cst_93 = arith.constant 0.000000e+00 : f32
      %203 = vector.broadcast %cst_93 : f32 to vector<8x1xf32>
      %204 = arith.subf %203, %202 : vector<8x1xf32>
      %205 = math.exp %204 : vector<8x1xf32>
      %cst_94 = arith.constant 1.000000e+00 : f32
      %206 = vector.broadcast %cst_94 : f32 to vector<8x1xf32>
      %207 = arith.addf %206, %205 : vector<8x1xf32>
      %208 = math.log %207 : vector<8x1xf32>
      %209 = arith.addf %201, %208 : vector<8x1xf32>
      %cst_95 = arith.constant 0.000000e+00 : f32
      %210 = vector.broadcast %cst_95 : f32 to vector<8x1xf32>
      %211 = arith.select %144, %209, %210 : vector<8x1xi1>, vector<8x1xf32>
      %212 = vector.shape_cast %211 : vector<8x1xf32> to vector<1x8x1xf32>
      %cst_96 = arith.constant dense<0.000000e+00> : vector<1xf32>
      %213 = vector.multi_reduction <add>, %212, %cst_96 [1, 2] : vector<1x8x1xf32> to vector<1xf32>
      %214 = vector.shape_cast %213 : vector<1xf32> to vector<1x1x1xf32>
      %215 = vector.extract %214[0, 0, 0] : f32 from vector<1x1x1xf32>
      %216 = vector.broadcast %215 : f32 to vector<1x1xf32>
      %217 = arith.addf %181, %216 : vector<1x1xf32>
      %c2_i32 = arith.constant 2 : i32
      %cst_97 = arith.constant 1.250000e-01 : f32
      %218 = vector.broadcast %cst_97 : f32 to vector<1x1xf32>
      %219 = arith.mulf %217, %218 : vector<1x1xf32>
      %220 = tpu.iota {dimensions = array<i32: 1>} : vector<1x128xi32>
      %c0_i32_98 = arith.constant 0 : i32
      %221 = vector.broadcast %c0_i32_98 : i32 to vector<1x128xi32>
      %222 = arith.cmpi eq, %220, %221 : vector<1x128xi32>
      %cst_99 = arith.constant 0.000000e+00 : f32
      %223 = vector.shape_cast %82 : vector<1x1xf32> to vector<1x1xf32>
      %224 = vector.broadcast %223 : vector<1x1xf32> to vector<1x128xf32>
      %225 = vector.broadcast %cst_99 : f32 to vector<1x128xf32>
      %226 = arith.select %222, %224, %225 : vector<1x128xi1>, vector<1x128xf32>
      %c1_i32_100 = arith.constant 1 : i32
      %227 = vector.broadcast %c1_i32_100 : i32 to vector<1x128xi32>
      %228 = arith.cmpi eq, %220, %227 : vector<1x128xi32>
      %cst_101 = arith.constant 0.000000e+00 : f32
      %229 = vector.shape_cast %141 : vector<1x1xf32> to vector<1x1xf32>
      %230 = vector.broadcast %229 : vector<1x1xf32> to vector<1x128xf32>
      %231 = vector.broadcast %cst_101 : f32 to vector<1x128xf32>
      %232 = arith.select %228, %230, %231 : vector<1x128xi1>, vector<1x128xf32>
      %233 = arith.addf %226, %232 : vector<1x128xf32>
      %c2_i32_102 = arith.constant 2 : i32
      %234 = vector.broadcast %c2_i32_102 : i32 to vector<1x128xi32>
      %235 = arith.cmpi eq, %220, %234 : vector<1x128xi32>
      %cst_103 = arith.constant 0.000000e+00 : f32
      %236 = vector.shape_cast %219 : vector<1x1xf32> to vector<1x1xf32>
      %237 = vector.broadcast %236 : vector<1x1xf32> to vector<1x128xf32>
      %238 = vector.broadcast %cst_103 : f32 to vector<1x128xf32>
      %239 = arith.select %235, %237, %238 : vector<1x128xi1>, vector<1x128xf32>
      %240 = arith.addf %233, %239 : vector<1x128xf32>
      %c0_104 = arith.constant 0 : index
      %c0_105 = arith.constant 0 : index
      %241 = vector.load %arg6[%c0_104, %c0_105] : memref<1x128xf32, #tpu.memory_space<vmem>>, vector<1x128xf32>
      tpu.vector_store %arg6[%c0_104, %c0_105], %240 {strides = array<i32>} : memref<1x128xf32, #tpu.memory_space<vmem>>, vector<1x128xf32>,
    } else {
    }
    return
  }
  func.func @transform_0(%arg0: i32) -> (i32, i32) {
    %c0_i32 = arith.constant 0 : i32
    %c0_i32_0 = arith.constant 0 : i32
    %c0_i32_1 = arith.constant 0 : i32
    return %c0_i32, %c0_i32_0 : i32, i32
  }
  func.func @transform_1(%arg0: i32) -> (i32, i32, i32) {
    %c0_i32 = arith.constant 0 : i32
    %c0_i32_0 = arith.constant 0 : i32
    %c0_i32_1 = arith.constant 0 : i32
    %c0_i32_2 = arith.constant 0 : i32
    return %c0_i32, %c0_i32_0, %c0_i32_1 : i32, i32, i32
  }
  func.func @transform_2(%arg0: i32) -> (i32, i32) {
    %c0_i32 = arith.constant 0 : i32
    %c0_i32_0 = arith.constant 0 : i32
    %c0_i32_1 = arith.constant 0 : i32
    return %c0_i32, %c0_i32_0 : i32, i32
  }
  func.func @transform_3(%arg0: i32) -> (i32, i32) {
    %c0_i32 = arith.constant 0 : i32
    %c0_i32_0 = arith.constant 0 : i32
    %c0_i32_1 = arith.constant 0 : i32
    return %c0_i32, %c0_i32_0 : i32, i32
  }
  func.func @transform_4(%arg0: i32) -> (i32, i32) {
    %c0_i32 = arith.constant 0 : i32
    %c0_i32_0 = arith.constant 0 : i32
    return %c0_i32, %arg0 : i32, i32
  }
  func.func @transform_5(%arg0: i32) -> (i32, i32) {
    %c0_i32 = arith.constant 0 : i32
    %c0_i32_0 = arith.constant 0 : i32
    %c0_i32_1 = arith.constant 0 : i32
    return %c0_i32, %c0_i32_0 : i32, i32
  }
}

</mosaic_0001>

<llo_original>
// kernel: loss_computation.1
$region0: #{loss_computation.1}
  #allocation0 [shape = 'u32[]', space=smem, size = 0x4, offset = 0x4, fixed_abs, tag = 'smem constant byte address 0x4 - core index']
  #allocation1 [shape = 'u32[72,128]{1,0:T(1,128)}', space=vmem, size = 0x9000, scoped, tag = 'internal scratch']
  #allocation2 [shape = 'f32[16,1]{1,0:T(8,128)}', space=vmem, size = 0x2000, scoped, tag = 'scratch operand']
  #allocation3 [shape = 'f32[16,1]{1,0:T(8,128)}', space=vmem, size = 0x2000, scoped, tag = 'scratch operand']
  #allocation4 [shape = 'f32[16,1]{1,0:T(8,128)}', space=vmem, size = 0x2000, scoped, tag = 'scratch operand']
  #allocation5 [shape = 'f32[16,1]{1,0:T(8,128)}', space=vmem, size = 0x2000, scoped, tag = 'scratch operand']
  %s0 = inlined_call_operand.vmem [shape: f32[16,128], index: 0, kind: input, shape index: {}]
  %s1 = inlined_call_operand.vmem [shape: f32[2,8,128], index: 1, kind: input, shape index: {}]
  %s2 = inlined_call_operand.vmem [shape: s32[16,1], index: 2, kind: input, shape index: {}]
  %s3 = inlined_call_operand.vmem [shape: s32[1,8], index: 3, kind: input, shape index: {}]
  %s4 = inlined_call_operand.vmem [shape: f32[128,128], index: 4, kind: input, shape index: {}]
  %s5 = inlined_call_operand.vmem [shape: f32[1,128], index: 5, kind: output, shape index: {}]
  %s6 = sld [smem:[#allocation0]]
  $region38: #{loss_computation.1} parent=0
    _
  %s8 = ssub.s32 1, %s6
  %s9 = scalar_select 0, %s8, %s6
  // Predicated region
  $region2: #{loss_computation.1} parent=0 // pred_check
    _
  $region3: #{loss_computation.1} parent=0 // pred_check_branch
    %11 = sbr.rel (0) target = $region5
  $region4: #{loss_computation.1} parent=0 // pred_region
    _
  $region5: #{loss_computation.1} parent=0 // pred_fallthru
    _
  // Predicated region
  $region6: #{loss_computation.1} parent=0 // pred_check
    _
  $region7: #{loss_computation.1} parent=0 // pred_check_branch
    %13 = sbr.rel (0) target = $region9
  $region8: #{loss_computation.1} parent=0 // pred_region
    _
  $region9: #{loss_computation.1} parent=0 // pred_fallthru
    _
  // Predicated region
  $region10: #{loss_computation.1} parent=0 // pred_check
    _
  $region11: #{loss_computation.1} parent=0 // pred_check_branch
    %15 = sbr.rel (0) target = $region13
  $region12: #{loss_computation.1} parent=0 // pred_region
    _
  $region13: #{loss_computation.1} parent=0 // pred_fallthru
    _
  // Predicated region
  $region14: #{loss_computation.1} parent=0 // pred_check
    _
  $region15: #{loss_computation.1} parent=0 // pred_check_branch
    %17 = sbr.rel (0) target = $region17
  $region16: #{loss_computation.1} parent=0 // pred_region
    _
  $region17: #{loss_computation.1} parent=0 // pred_fallthru
    _
  // Predicated region
  $region18: #{loss_computation.1} parent=0 // pred_check
    _
  $region19: #{loss_computation.1} parent=0 // pred_check_branch
    %19 = sbr.rel (0) target = $region21
  $region20: #{loss_computation.1} parent=0 // pred_region
    _
  $region21: #{loss_computation.1} parent=0 // pred_fallthru
    _
  %p20 = scmp.eq.s32.totalorder 0, 0
  // Predicated region
  $region22: #{loss_computation.1} parent=0 // pred_check
    %p21 = pneg %p20
  $region23: #{loss_computation.1} parent=0 // pred_check_branch
    %23 = sbr.rel (%p21) target = $region25
  $region24: #{loss_computation.1} parent=0 // pred_region
    %vm24 = vcmask 7168
    %25 = vst.msk [vmem:[#allocation2] sm:$0xff] %vm24, -1e+30
    %26 = vst.msk [vmem:[#allocation2 + $0x8] sm:$0xff] %vm24, -1e+30
    %27 = vst.msk [vmem:[#allocation3] sm:$0xff] %vm24, 0.0
    %28 = vst.msk [vmem:[#allocation3 + $0x8] sm:$0xff] %vm24, 0.0
    %29 = vst.msk [vmem:[#allocation4] sm:$0xff] %vm24, 0.0
    %30 = vst.msk [vmem:[#allocation4 + $0x8] sm:$0xff] %vm24, 0.0
    %31 = vst.msk [vmem:[#allocation5] sm:$0xff] %vm24, 0.0
    %32 = vst.msk [vmem:[#allocation5 + $0x8] sm:$0xff] %vm24, 0.0
  $region25: #{loss_computation.1} parent=0 // pred_fallthru
    _
  %v33 = vld [vmem:[%s0] sm:$0xff]
  %v34 = vld [vmem:[%s0 + $0x8] sm:$0xff]
  %v35 = vld [vmem:[%s4] sm:$0xff]
  %v36 = vld [vmem:[%s4 + $0x8] sm:$0xff]
  %v37 = vld [vmem:[%s4 + $0x10] sm:$0xff]
  %v38 = vld [vmem:[%s4 + $0x18] sm:$0xff]
  %v39 = vld [vmem:[%s4 + $0x20] sm:$0xff]
  %v40 = vld [vmem:[%s4 + $0x28] sm:$0xff]
  %v41 = vld [vmem:[%s4 + $0x30] sm:$0xff]
  %v42 = vld [vmem:[%s4 + $0x38] sm:$0xff]
  %v43 = vld [vmem:[%s4 + $0x40] sm:$0xff]
  %v44 = vld [vmem:[%s4 + $0x48] sm:$0xff]
  %v45 = vld [vmem:[%s4 + $0x50] sm:$0xff]
  %v46 = vld [vmem:[%s4 + $0x58] sm:$0xff]
  %v47 = vld [vmem:[%s4 + $0x60] sm:$0xff]
  %v48 = vld [vmem:[%s4 + $0x68] sm:$0xff]
  %v49 = vld [vmem:[%s4 + $0x70] sm:$0xff]
  %v50 = vld [vmem:[%s4 + $0x78] sm:$0xff]
  %51 = vmatpush.msra.mxu0 %v50
  %52 = vmatpush.msra.mxu0 %v49
  %53 = vmatpush.msra.mxu0 %v48
  %54 = vmatpush.msra.mxu0 %v47
  %55 = vmatpush.msra.mxu0 %v46
  %56 = vmatpush.msra.mxu0 %v45
  %57 = vmatpush.msra.mxu0 %v44
  %58 = vmatpush.msra.mxu0 %v43
  %59 = vmatpush.msra.mxu0 %v42
  %60 = vmatpush.msra.mxu0 %v41
  %61 = vmatpush.msra.mxu0 %v40
  %62 = vmatpush.msra.mxu0 %v39
  %63 = vmatpush.msra.mxu0 %v38
  %64 = vmatpush.msra.mxu0 %v37
  %65 = vmatpush.msra.mxu0 %v36
  %66 = vmatpush.msra.mxu0 %v35
  %67 = vmatmul.f32.gmra.mxu0 %v33
  %v68 = vpop.f32.mrf.mxu0
  %v69 = vadd.f32 0.0, %v68
  %70 = vmatmul.f32.gmra.mxu0 %v34
  %v71 = vpop.f32.mrf.mxu0
  %v72 = vadd.f32 0.0, %v71
  %73 = vdwg.mxu0
  %s74 = smul.u32 0, 128
  %v75 = vlaneseq
  %v76 = vand.u32 %v75, 127
  %v77 = vstv %s74
  %v78 = vadd.s32 %v77, %v76
  %vm79 = vcmp.lt.s32.totalorder %v78, 16
  %v80 = vsel %vm79, %v69, -1e+30
  %v81 = vsel %vm79, %v72, -1e+30
  %82 = vmax.xlane.f32.xlu0 %v80
  %v83 = vpop.xlane.xlu0 %82
  %84 = vmax.xlane.f32.xlu0 %v81
  %v85 = vpop.xlane.xlu0 %84
  %v86 = vld [vmem:[#allocation2] sm:$0xff]
  %v87 = vld [vmem:[#allocation2 + $0x8] sm:$0xff]
  %v88 = vmax.f32 %v86, %v83
  %v89 = vmax.f32 %v87, %v85
  %v90 = vsub.f32 %v86, %v88
  %v91 = vsub.f32 %v87, %v89
  %v92 = vmul.f32 %v90, 1.442695
  %v93 = vpow.pop %v92
  %v94 = vmul.f32 %v91, 1.442695
  %v95 = vpow.pop %v94
  %97 = vset.pattern.permute.xlu0 0
  %98 = vperm.xlu0 %97, %v88
  %v99 = vpop.permute.xlu0 %98
  %102 = vset.pattern.permute.xlu0 0
  %103 = vperm.xlu0 %102, %v89
  %v104 = vpop.permute.xlu0 %103
  %v106 = vsub.f32 %v69, %v99
  %v107 = vsub.f32 %v72, %v104
  %v108 = vmul.f32 %v106, 1.442695
  %v109 = vpow.pop %v108
  %v110 = vmul.f32 %v107, 1.442695
  %v111 = vpow.pop %v110
  %v112 = vsel %vm79, %v109, 0.0
  %v113 = vsel %vm79, %v111, 0.0
  %v114 = vld [vmem:[#allocation3] sm:$0xff]
  %v115 = vld [vmem:[#allocation3 + $0x8] sm:$0xff]
  %v116 = vmul.f32 %v93, %v114
  %v117 = vmul.f32 %v95, %v115
  %118 = vadd.xlane.f32.xlu0 %v112
  %v119 = vpop.xlane.xlu0 %118
  %120 = vadd.xlane.f32.xlu0 %v113
  %v121 = vpop.xlane.xlu0 %120
  %v122 = vadd.f32 %v116, %v119
  %v123 = vadd.f32 %v117, %v121
  %vm124 = vcmask 7168
  %125 = vst.msk [vmem:[#allocation3] sm:$0xff] %vm124, %v122
  %126 = vst.msk [vmem:[#allocation3 + $0x8] sm:$0xff] %vm124, %v123
  %127 = vst.msk [vmem:[#allocation2] sm:$0xff] %vm124, %v88
  %128 = vst.msk [vmem:[#allocation2 + $0x8] sm:$0xff] %vm124, %v89
  %v129 = vld [vmem:[#allocation4] sm:$0xff]
  %v130 = vld [vmem:[#allocation4 + $0x8] sm:$0xff]
  %v131 = vsel %vm79, %v69, 0.0
  %v132 = vsel %vm79, %v72, 0.0
  %133 = vadd.xlane.f32.xlu0 %v131
  %v134 = vpop.xlane.xlu0 %133
  %135 = vadd.xlane.f32.xlu0 %v132
  %v136 = vpop.xlane.xlu0 %135
  %v137 = vadd.f32 %v129, %v134
  %v138 = vadd.f32 %v130, %v136
  %139 = vst.msk [vmem:[#allocation4] sm:$0xff] %vm124, %v137
  %140 = vst.msk [vmem:[#allocation4 + $0x8] sm:$0xff] %vm124, %v138
  %v141 = vld [vmem:[#allocation5] sm:$0xff]
  %v142 = vld [vmem:[#allocation5 + $0x8] sm:$0xff]
  %v143 = vld [vmem:[%s2] sm:$0xff]
  %v144 = vld [vmem:[%s2 + $0x8] sm:$0xff]
  %145 = vset.pattern.permute.xlu0 0
  %146 = vperm.xlu0 %145, %v143
  %v147 = vpop.permute.xlu0 %146
  %148 = vset.pattern.permute.xlu0 0
  %149 = vperm.xlu0 %148, %v144
  %v150 = vpop.permute.xlu0 %149
  %vm151 = vcmp.eq.s32.totalorder %v78, %v147
  %vm152 = vcmp.eq.s32.totalorder %v78, %v150
  %v153 = vsel %vm151, %v69, 0.0
  %v154 = vsel %vm152, %v72, 0.0
  %155 = vadd.xlane.f32.xlu0 %v153
  %v156 = vpop.xlane.xlu0 %155
  %157 = vadd.xlane.f32.xlu0 %v154
  %v158 = vpop.xlane.xlu0 %157
  %v159 = vadd.f32 %v141, %v156
  %v160 = vadd.f32 %v142, %v158
  %161 = vst.msk [vmem:[#allocation5] sm:$0xff] %vm124, %v159
  %162 = vst.msk [vmem:[#allocation5 + $0x8] sm:$0xff] %vm124, %v160
  // Predicated region
  $region26: #{loss_computation.1} parent=0 // pred_check
    %p163 = pneg %p20
  $region27: #{loss_computation.1} parent=0 // pred_check_branch
    %165 = sbr.rel (%p163) target = $region29
  $region28: #{loss_computation.1} parent=0 // pred_region
    %v166 = vld [vmem:[#allocation2] sm:$0xff]
    %v167 = vld [vmem:[#allocation2 + $0x8] sm:$0xff]
    %v168 = vld [vmem:[#allocation3] sm:$0xff]
    %v169 = vld [vmem:[#allocation3 + $0x8] sm:$0xff]
    %v170 = vlog2.pop %v168
    %v171 = vmul.f32 %v170, 0.6931472
    %v172 = vlog2.pop %v169
    %v173 = vmul.f32 %v172, 0.6931472
    %v174 = vadd.f32 %v166, %v171
    %v175 = vadd.f32 %v167, %v173
    %v176 = vld [vmem:[#allocation5] sm:$0xff]
    %v177 = vld [vmem:[#allocation5 + $0x8] sm:$0xff]
    %v178 = vmul.f32 %v176, 0.9
    %v179 = vmul.f32 %v177, 0.9
    %v180 = vsub.f32 %v174, %v178
    %v181 = vsub.f32 %v175, %v179
    %v182 = vld [vmem:[#allocation4] sm:$0xff]
    %v183 = vld [vmem:[#allocation4 + $0x8] sm:$0xff]
    %v184 = vmul.f32 %v182, 0.00625
    %v185 = vmul.f32 %v183, 0.00625
    %v186 = vsub.f32 %v180, %v184
    %v187 = vsub.f32 %v181, %v185
    %v188 = vlaneseq
    %v189 = vshrl.u32 %v188, 7
    %v190 = vadd.s32 %v189, 8
    %vm191 = vcmp.lt.s32.totalorder %v189, 8
    %vm192 = vcmp.lt.s32.totalorder %v190, 8
    %vm193 = vcmp.ge.s32.totalorder %v189, 8
    %vm194 = vcmp.ge.s32.totalorder %v190, 8
    %vm195 = vcmp.lt.s32.totalorder %v189, 16
    %vm196 = vcmp.lt.s32.totalorder %v190, 16
    %vm197 = vmand %vm193, %vm195
    %vm198 = vmand %vm194, %vm196
    %vm199 = vmor %vm191, %vm197
    %vm200 = vmor %vm192, %vm198
    %v201 = vsel %vm199, %v186, 0.0
    %v202 = vsel %vm200, %v187, 0.0
    %v203 = vsel %vm124, %v201, 0.0
    %v204 = vsel %vm124, %v202, 0.0
    %v205 = vadd.f32 %v203, %v204
    %206 = vadd.xlane.f32.xlu0 %v205
    %v207 = vpop.xlane.xlu0 %206
    %v208 = vrot.slane %v207, 4
    %v209 = vadd.f32 %v207, %v208
    %v210 = vrot.slane %v209, 2
    %v211 = vadd.f32 %v209, %v210
    %v212 = vrot.slane %v211, 1
    %v213 = vadd.f32 %v211, %v212
    %s214 = vtos %v213
    %v215 = vstv %s214
    %v216 = vmul.f32 %v215, 0.125
    %v217 = vmul.f32 %v33, %v33
    %218 = vadd.xlane.f32.xlu0 %v217
    %v219 = vpop.xlane.xlu0 %218
    %v220 = vmax.f32 %v219, 1e-24
    %v221 = vrsqrt.pop %v220
    %v222 = vmul.f32 %v221, %v220
    %v223 = vmul.f32 %v222, %v221
    %v224 = vmul.f32 0.5, %v223
    %v225 = vsub.f32 1.5, %v224
    %v226 = vmul.f32 %v221, %v225
    %vm227 = vweird.f32 %v220
    %vm228 = vweird.f32 %v221
    %vm229 = vmor %vm227, %vm228
    %v230 = vsel %vm229, %v221, %v226
    %v231 = vmul.f32 %v33, %v230
    %v232 = vmul.f32 %v34, %v34
    %233 = vadd.xlane.f32.xlu0 %v232
    %v234 = vpop.xlane.xlu0 %233
    %v235 = vmax.f32 %v234, 1e-24
    %v236 = vrsqrt.pop %v235
    %v237 = vmul.f32 %v236, %v235
    %v238 = vmul.f32 %v237, %v236
    %v239 = vmul.f32 0.5, %v238
    %v240 = vsub.f32 1.5, %v239
    %v241 = vmul.f32 %v236, %v240
    %vm242 = vweird.f32 %v235
    %vm243 = vweird.f32 %v236
    %vm244 = vmor %vm242, %vm243
    %v245 = vsel %vm244, %v236, %v241
    %v246 = vmul.f32 %v34, %v245
    %247 = vmatpush.xpose.msra.mxu0 0.0
    %248 = vmatpush.xpose.msra.mxu0 0.0
    %249 = vmatpush.xpose.msra.mxu0 0.0
    %250 = vmatpush.xpose.msra.mxu0 0.0
    %251 = vmatpush.xpose.msra.mxu0 0.0
    %252 = vmatpush.xpose.msra.mxu0 0.0
    %253 = vmatpush.xpose.msra.mxu0 0.0
    %254 = vmatpush.xpose.msra.mxu0 0.0
    %255 = vmatpush.xpose.msra.mxu0 0.0
    %256 = vmatpush.xpose.msra.mxu0 0.0
    %257 = vmatpush.xpose.msra.mxu0 0.0
    %258 = vmatpush.xpose.msra.mxu0 0.0
    %259 = vmatpush.xpose.msra.mxu0 0.0
    %260 = vmatpush.xpose.msra.mxu0 0.0
    %261 = vmatpush.xpose.msra.mxu0 0.0
    %262 = vmatpush.xpose.msra.mxu0 %v246
    %263 = vmatmul.f32.gmra.mxu0 %v231
    %v264 = vpop.f32.mrf.mxu0
    %v265 = vadd.f32 0.0, %v264
    %266 = vdwg.mxu0
    %v267 = vld [vmem:[%s2] sm:$0xff]
    %v268 = vld [vmem:[%s3] sm:$0x1]
    %269 = vset.pattern.permute.xlu0 0
    %270 = vperm.xlu0 %269, %v267
    %v271 = vpop.permute.xlu0 %270
    %v272 = vperm.slane %v268, 0
    %vm273 = vcmp.eq.s32.totalorder %v271, %v272
    %v274 = vsub.f32 %v265, 0.6
    %v275 = vmul.f32 %v274, -10.0
    %v276 = vsub.f32 %v265, 0.4
    %v277 = vmul.f32 %v276, 40.0
    %v278 = vsel %vm273, %v275, %v277
    %vm279 = vcmp.lt.s32.totalorder %v76, 8
    %vm280 = vmand %vm191, %vm279
    %v281 = vmax.f32 %v278, 0.0
    %v282 = vand.u32 2147483647, %v278
    %v283 = vsub.f32 0.0, %v282
    %v284 = vmul.f32 %v283, 1.442695
    %v285 = vpow.pop %v284
    %v286 = vadd.f32 %v285, 1.0
    %v287 = vlog2.pop %v286
    %v288 = vmul.f32 %v287, 0.6931472
    %v289 = vadd.f32 %v281, %v288
    %v290 = vsel %vm280, %v289, 0.0
    %vm291 = vcmask 64512
    %v292 = vsel %vm291, %v290, 0.0
    %293 = vadd.xlane.f32.xlu0 %v292
    %v294 = vpop.xlane.xlu0 %293
    %v295 = vrot.slane %v294, 4
    %v296 = vadd.f32 %v294, %v295
    %v297 = vrot.slane %v296, 2
    %v298 = vadd.f32 %v296, %v297
    %v299 = vrot.slane %v298, 1
    %v300 = vadd.f32 %v298, %v299
    %s301 = vtos %v300
    %v302 = vstv %s301
    %v303 = vmul.f32 %v302, 0.125
    %v304 = vld [vmem:[%s1] sm:$0xff]
    %v305 = vmul.f32 %v304, %v304
    %306 = vadd.xlane.f32.xlu0 %v305
    %v307 = vpop.xlane.xlu0 %306
    %v308 = vmax.f32 %v307, 1e-24
    %v309 = vrsqrt.pop %v308
    %v310 = vmul.f32 %v309, %v308
    %v311 = vmul.f32 %v310, %v309
    %v312 = vmul.f32 0.5, %v311
    %v313 = vsub.f32 1.5, %v312
    %v314 = vmul.f32 %v309, %v313
    %vm315 = vweird.f32 %v308
    %vm316 = vweird.f32 %v309
    %vm317 = vmor %vm315, %vm316
    %v318 = vsel %vm317, %v309, %v314
    %v319 = vmul.f32 %v304, %v318
    %v320 = vmul.f32 %v231, %v319
    %321 = vadd.xlane.f32.xlu0 %v320
    %v322 = vpop.xlane.xlu0 %321
    %v323 = vsub.f32 %v322, 0.4
    %v324 = vmul.f32 %v323, 40.0
    %v325 = vmax.f32 %v324, 0.0
    %v326 = vand.u32 2147483647, %v324
    %v327 = vsub.f32 0.0, %v326
    %v328 = vmul.f32 %v327, 1.442695
    %v329 = vpow.pop %v328
    %v330 = vadd.f32 %v329, 1.0
    %v331 = vlog2.pop %v330
    %v332 = vmul.f32 %v331, 0.6931472
    %v333 = vadd.f32 %v325, %v332
    %v334 = vsel %vm191, %v333, 0.0
    %v335 = vsel %vm124, %v334, 0.0
    %336 = vadd.xlane.f32.xlu0 %v335
    %v337 = vpop.xlane.xlu0 %336
    %v338 = vrot.slane %v337, 4
    %v339 = vadd.f32 %v337, %v338
    %v340 = vrot.slane %v339, 2
    %v341 = vadd.f32 %v339, %v340
    %v342 = vrot.slane %v341, 1
    %v343 = vadd.f32 %v341, %v342
    %s344 = vtos %v343
    %v345 = vstv %s344
    %v346 = vadd.f32 %v345, 0.0
    %s347 = scalar_lea.vmem %s1, 8
    %v348 = vld [vmem:[%s347] sm:$0xff]
    %v349 = vmul.f32 %v348, %v348
    %350 = vadd.xlane.f32.xlu0 %v349
    %v351 = vpop.xlane.xlu0 %350
    %v352 = vmax.f32 %v351, 1e-24
    %v353 = vrsqrt.pop %v352
    %v354 = vmul.f32 %v353, %v352
    %v355 = vmul.f32 %v354, %v353
    %v356 = vmul.f32 0.5, %v355
    %v357 = vsub.f32 1.5, %v356
    %v358 = vmul.f32 %v353, %v357
    %vm359 = vweird.f32 %v352
    %vm360 = vweird.f32 %v353
    %vm361 = vmor %vm359, %vm360
    %v362 = vsel %vm361, %v353, %v358
    %v363 = vmul.f32 %v348, %v362
    %v364 = vmul.f32 %v231, %v363
    %365 = vadd.xlane.f32.xlu0 %v364
    %v366 = vpop.xlane.xlu0 %365
    %v367 = vsub.f32 %v366, 0.4
    %v368 = vmul.f32 %v367, 40.0
    %v369 = vmax.f32 %v368, 0.0
    %v370 = vand.u32 2147483647, %v368
    %v371 = vsub.f32 0.0, %v370
    %v372 = vmul.f32 %v371, 1.442695
    %v373 = vpow.pop %v372
    %v374 = vadd.f32 %v373, 1.0
    %v375 = vlog2.pop %v374
    %v376 = vmul.f32 %v375, 0.6931472
    %v377 = vadd.f32 %v369, %v376
    %v378 = vsel %vm191, %v377, 0.0
    %v379 = vsel %vm124, %v378, 0.0
    %380 = vadd.xlane.f32.xlu0 %v379
    %v381 = vpop.xlane.xlu0 %380
    %v382 = vrot.slane %v381, 4
    %v383 = vadd.f32 %v381, %v382
    %v384 = vrot.slane %v383, 2
    %v385 = vadd.f32 %v383, %v384
    %v386 = vrot.slane %v385, 1
    %v387 = vadd.f32 %v385, %v386
    %s388 = vtos %v387
    %v389 = vstv %s388
    %v390 = vadd.f32 %v346, %v389
    %v391 = vmul.f32 %v390, 0.125
    %vm392 = vcmp.eq.s32.totalorder %v76, 0
    %v393 = vsel %vm392, %v216, 0.0
    %vm394 = vcmp.eq.s32.totalorder %v76, 1
    %v395 = vsel %vm394, %v303, 0.0
    %v396 = vadd.f32 %v393, %v395
    %vm397 = vcmp.eq.s32.totalorder %v76, 2
    %v398 = vsel %vm397, %v391, 0.0
    %v399 = vadd.f32 %v396, %v398
    %400 = vst [vmem:[%s5] sm:$0x1] %v399
  $region29: #{loss_computation.1} parent=0 // pred_fallthru
    _
  // Predicated region
  $region30: #{loss_computation.1} parent=0 // pred_check
    _
  $region31: #{loss_computation.1} parent=0 // pred_check_branch
    %402 = sbr.rel (0) target = $region33
  $region32: #{loss_computation.1} parent=0 // pred_region
    _
  $region33: #{loss_computation.1} parent=0 // pred_fallthru
    _
  // Predicated region
  $region34: #{loss_computation.1} parent=0 // pred_check
    _
  $region35: #{loss_computation.1} parent=0 // pred_check_branch
    %404 = sbr.rel (0) target = $region37
  $region36: #{loss_computation.1} parent=0 // pred_region
    _
  $region37: #{loss_computation.1} parent=0 // pred_fallthru
    _

</llo_original>
